<compile_context>
chip_gen: v6e
topology: v6e:2x2x1
jax: 0.10.0
libtpu: 0.0.40
codegen_flags: <defaults>
</compile_context>

<pallas_src>
import jax
import jax.numpy as jnp
from jax.experimental import pallas as pl
from jax.experimental.pallas import tpu as pltpu


def _cdiv(a: int, b: int) -> int:
    return -(-a // b)


def _round_up(a: int, b: int) -> int:
    return _cdiv(a, b) * b


def _h_sigmoid_kernel(x_ref, o_ref):
    # Compute in f32 regardless of input dtype: the kernel is HBM-bound and the
    # VPU has huge slack, so the widening cast is free and bf16 inputs match
    # torch's relu6(x+3)/6 to within one output ulp.
    x = x_ref[...].astype(jnp.float32)
    y = jnp.clip(x + 3.0, 0.0, 6.0) * (1.0 / 6.0)
    o_ref[...] = y.astype(o_ref.dtype)


def _h_sigmoid_jnp(x: jax.Array) -> jax.Array:
    # Pure-JAX reference / fallback (XLA's fused elementwise is at roofline).
    return jnp.clip(x + 3.0, 0.0, 6.0) / 6.0


_LANE_CANDIDATES = (4096, 2048, 1024, 512, 256, 128)


def _chip_block_bytes() -> int:
    """Per-generation block size. Bigger tiles on chips with faster HBM /
    larger scoped-VMEM default; conservative 2 MiB otherwise (v5e)."""
    try:
        kind = jax.devices()[0].device_kind.lower()
    except Exception:
        kind = ""
    if "v7" in kind:
        return 6 * 1024 * 1024   # 4 bufs = 24 MiB < 32 MiB scoped default, << 64 MiB VMEM
    if "v6" in kind:
        return 4 * 1024 * 1024   # 4 bufs = 16 MiB < 32 MiB scoped default
    return 2 * 1024 * 1024       # v5e: 4 bufs = 8 MiB < 16 MiB scoped default


def _h_sigmoid_pallas_2d(x2: jax.Array, block_bytes: int, donate_input: bool) -> jax.Array:
    """Run the kernel on a lane-dense (rows, lanes) slab, lanes % 128 == 0."""
    rows, lanes = x2.shape
    itemsize = jnp.dtype(x2.dtype).itemsize
    # Native sublane tile: 8 rows for 32-bit, 16 for bf16, 32 for int8/fp8.
    sub = max(8, (8 * 4) // itemsize)
    bytes_per_row = lanes * itemsize
    max_block_rows = max(sub, (block_bytes // bytes_per_row) // sub * sub)

    if rows <= sub:
        block_rows = rows                      # block == full array dims: legal
    elif rows <= max_block_rows:
        # Fits in one block, but split in two so both v7x TensorCores get work
        # (neutral on the single-core v5e/v6e).
        block_rows = _round_up(_cdiv(rows, 2), sub)
    else:
        block_rows = max_block_rows
    num_blocks = _cdiv(rows, block_rows)       # partial last block is masked

    # Small odd grids shard 2-vs-1 / 3-vs-2 across v7x's two TCs; round the
    # block so the grid is even whenever that actually works out.
    if 1 < num_blocks <= 8 and num_blocks % 2 == 1:
        cand = _round_up(_cdiv(rows, num_blocks + 1), sub)
        if cand > 0 and _cdiv(rows, cand) % 2 == 0:
            block_rows = cand
            num_blocks = _cdiv(rows, cand)

    n = rows * lanes
    vmem_limit = min(4 * block_bytes + (4 << 20), 64 << 20)

    return pl.pallas_call(
        _h_sigmoid_kernel,
        out_shape=jax.ShapeDtypeStruct((rows, lanes), x2.dtype),
        grid=(num_blocks,),
        in_specs=[pl.BlockSpec((block_rows, lanes), lambda i: (i, 0))],
        out_specs=pl.BlockSpec((block_rows, lanes), lambda i: (i, 0)),
        compiler_params=pltpu.CompilerParams(
            # TODO(synk): verify with a trace that "parallel" shards across both
            # v7x TensorCores; if not, switch this axis to pltpu.CORE_PARALLEL.
            dimension_semantics=("parallel",),
            vmem_limit_bytes=vmem_limit,
        ),
        cost_estimate=pl.CostEstimate(
            flops=4 * n,                       # add + max + min + mul per element
            transcendentals=0,
            bytes_accessed=2 * n * itemsize,   # one read + one write pass
        ),
        input_output_aliases=({0: 0} if donate_input else {}),
    )(x2)


def _h_sigmoid_flat_aligned(flat: jax.Array, block_bytes: int, donate_input: bool) -> jax.Array:
    """flat.size is a multiple of 128; pick the widest lane count that divides it."""
    n = flat.shape[0]
    lanes = 128
    for cand in _LANE_CANDIDATES:
        if n % cand == 0:
            lanes = cand
            break
    rows = n // lanes
    out2 = _h_sigmoid_pallas_2d(flat.reshape(rows, lanes), block_bytes, donate_input)
    return out2.reshape(-1)


def h_sigmoid(
    x: jax.Array,
    *,
    target_block_bytes: int | None = None,
    min_pallas_bytes: int = 128 * 1024,
    force_pallas: bool = False,
    donate_input: bool = False,
) -> jax.Array:
    """Elementwise hard-sigmoid ReLU6(x+3)/6, matching the PyTorch module."""
    orig_shape = x.shape
    orig_dtype = x.dtype
    n = x.size
    if n == 0:
        return x

    itemsize = jnp.dtype(orig_dtype).itemsize
    if not force_pallas and n * itemsize < min_pallas_bytes:
        # Kernel launch / grid overhead dominates tiny tensors.
        return _h_sigmoid_jnp(x)

    block_bytes = target_block_bytes if target_block_bytes is not None else _chip_block_bytes()

    tail = n % 128
    if tail == 0:
        flat = x.reshape(-1)
        out = _h_sigmoid_flat_aligned(flat, block_bytes, donate_input)
        return out.reshape(orig_shape)

    # Non-multiple-of-128 element count.
    bulk = n - tail
    if not force_pallas or bulk == 0:
        # No pad/slice HBM copies: XLA's fused elementwise is already at
        # roofline for this memory-bound op, so the Pallas path buys nothing.
        return _h_sigmoid_jnp(x)

    # Forced Pallas path (used for coverage): process the aligned bulk with the
    # kernel and only the <128-element tail with jnp. No whole-tensor pad copy.
    flat = x.reshape(-1)
    bulk_out = _h_sigmoid_flat_aligned(flat[:bulk], block_bytes, False)
    tail_out = _h_sigmoid_jnp(flat[bulk:]).astype(orig_dtype)
    return jnp.concatenate([bulk_out, tail_out]).reshape(orig_shape)


if __name__ == "__main__":
    key = jax.random.PRNGKey(0)
    k1, k2, k3, k4 = jax.random.split(key, 4)

    # Small NCHW input matching the module spec; force the Pallas path so the
    # kernel itself is exercised.
    x_small = jax.random.normal(k1, (2, 4, 16, 16), dtype=jnp.float32) * 4.0
    y_small = jax.block_until_ready(h_sigmoid(x_small, force_pallas=True))
    assert y_small.shape == x_small.shape and y_small.dtype == x_small.dtype
    assert jnp.allclose(y_small, _h_sigmoid_jnp(x_small), atol=1e-6, rtol=1e-6)

    # Larger input: multi-block grid, even split, "parallel" sharding path.
    x_big = jax.random.normal(k2, (8, 32, 32, 32), dtype=jnp.float32) * 4.0
    y_big = jax.block_until_ready(h_sigmoid(x_big))
    assert y_big.shape == x_big.shape and y_big.dtype == x_big.dtype
    assert jnp.allclose(y_big, _h_sigmoid_jnp(x_big), atol=1e-6, rtol=1e-6)

    # Awkward element count: aligned bulk via Pallas + tiny jnp tail (no pad copy).
    x_odd = jax.random.normal(k3, (3, 5, 7, 11), dtype=jnp.float32) * 4.0
    y_odd = jax.block_until_ready(h_sigmoid(x_odd, force_pallas=True))
    assert y_odd.shape == x_odd.shape and y_odd.dtype == x_odd.dtype
    assert jnp.allclose(y_odd, _h_sigmoid_jnp(x_odd), atol=1e-6, rtol=1e-6)

    # bf16 activations: exercises the 16-row sublane tile and f32 internal math.
    x_bf = (jax.random.normal(k4, (4, 8, 32, 32), dtype=jnp.float32) * 4.0).astype(jnp.bfloat16)
    y_bf = jax.block_until_ready(h_sigmoid(x_bf, force_pallas=True))
    ref_bf = _h_sigmoid_jnp(x_bf.astype(jnp.float32)).astype(jnp.bfloat16)
    assert y_bf.shape == x_bf.shape and y_bf.dtype == jnp.bfloat16
    assert jnp.allclose(y_bf.astype(jnp.float32), ref_bf.astype(jnp.float32), atol=1e-2)

    print("KERNEL_OK")
</pallas_src>

<mosaic_0001>
module attributes {stable_mosaic.version = 11 : i64} {
  func.func @_h_sigmoid_kernel(%arg0: i32, %arg1: memref<1x2048xf32, #tpu.memory_space<vmem>>, %arg2: memref<1x2048xf32, #tpu.memory_space<vmem>>) attributes {dimension_semantics = [#tpu.dimension_semantics<parallel>], iteration_bounds = array<i64: 1>, scalar_prefetch = 0 : i64, scratch_operands = 0 : i64, tpu.core_type = #tpu.core_type<tc>, window_params = [{transform_indices = @transform_0, window_bounds = array<i64: 1, 2048>}, {transform_indices = @transform_1, window_bounds = array<i64: 1, 2048>}]} {
    %c0 = arith.constant 0 : index
    %c0_0 = arith.constant 0 : index
    %0 = vector.load %arg1[%c0, %c0_0] : memref<1x2048xf32, #tpu.memory_space<vmem>>, vector<1x2048xf32>
    %cst = arith.constant 3.000000e+00 : f32
    %1 = vector.broadcast %cst : f32 to vector<1x2048xf32>
    %2 = arith.addf %0, %1 : vector<1x2048xf32>
    %cst_1 = arith.constant 0.000000e+00 : f32
    %cst_2 = arith.constant 6.000000e+00 : f32
    %3 = vector.broadcast %cst_1 : f32 to vector<1x2048xf32>
    %4 = arith.maximumf %3, %2 : vector<1x2048xf32>
    %5 = vector.broadcast %cst_2 : f32 to vector<1x2048xf32>
    %6 = arith.minimumf %5, %4 : vector<1x2048xf32>
    %cst_3 = arith.constant 0.166666672 : f32
    %7 = vector.broadcast %cst_3 : f32 to vector<1x2048xf32>
    %8 = arith.mulf %6, %7 : vector<1x2048xf32>
    %c0_4 = arith.constant 0 : index
    %c0_5 = arith.constant 0 : index
    %9 = vector.load %arg2[%c0_4, %c0_5] : memref<1x2048xf32, #tpu.memory_space<vmem>>, vector<1x2048xf32>
    tpu.vector_store %arg2[%c0_4, %c0_5], %8 {strides = array<i32>} : memref<1x2048xf32, #tpu.memory_space<vmem>>, vector<1x2048xf32>,
    return
  }
  func.func @transform_0(%arg0: i32) -> (i32, i32) {
    %c0_i32 = arith.constant 0 : i32
    %c0_i32_0 = arith.constant 0 : i32
    return %arg0, %c0_i32 : i32, i32
  }
  func.func @transform_1(%arg0: i32) -> (i32, i32) {
    %c0_i32 = arith.constant 0 : i32
    %c0_i32_0 = arith.constant 0 : i32
    return %arg0, %c0_i32 : i32, i32
  }
}

</mosaic_0001>

<llo_original>
// kernel: tpu_custom_call.1
$region0: #{tpu_custom_call.1}
  #allocation0 [shape = 'u32[]', space=smem, size = 0x4, offset = 0x4, fixed_abs, tag = 'smem constant byte address 0x4 - core index']
  #allocation1 [shape = 'u32[144,128]{1,0:T(1,128)}', space=vmem, size = 0x12000, scoped, tag = 'internal scratch']
  %s0 = inlined_call_operand.hbm [shape: f32[1,2048], index: 0, kind: input, shape index: {}]
  %s1 = inlined_call_operand.hbm [shape: f32[1,2048], index: 1, kind: output, shape index: {}]
  %s2 = sld [smem:[#allocation0]]
  $region18: #{tpu_custom_call.1} parent=0
    _
  %s4 = ssub.s32 1, %s2
  %s5 = scalar_select 0, %s4, %s2
  $region1: #{tpu_custom_call.1} parent=0
    #allocation2 [shape = 'u8[8192]{0}', space=vmem, size = 0x2000, scoped, tag = 'input window, operand 0, single buffered']
    #allocation3 [shape = 's32[1]{0}', space=sflag, size = 0x4, scoped, tag = 'scoped memory for tpu_custom_call.1']
    #allocation4 [shape = 's32[1]{0}', space=sflag, size = 0x4, scoped, tag = 'scoped memory for tpu_custom_call.1']
    #allocation5 [shape = 'u8[8192]{0}', space=vmem, size = 0x2000, scoped, tag = 'output window, operand 0, single buffered']
    %6 = vsyncpa [#allocation3], 0
    %7 = vsyncpa [#allocation4], 0
    // Predicated region
    $region2: #{tpu_custom_call.1} parent=1 // pred_check
      _
    $region3: #{tpu_custom_call.1} parent=1 // pred_check_branch
      %9 = sbr.rel (0) target = $region5
    $region4: #{tpu_custom_call.1} parent=1 // pred_region
      %s11 = ssub.s32 256, 256
      %12 = vsyncadd [#allocation3], %s11
      %s14 = sshll.u32 [#allocation2], 4
      %s15 = int_to_ptr.vmem [resolvable:$true] %s14
      %17 = dma.hbm_to_vmem [thread:$0]  %s0, 256, %s15, [#allocation3]
    $region5: #{tpu_custom_call.1} parent=1 // pred_fallthru
      _
    // Predicated region
    $region6: #{tpu_custom_call.1} parent=1 // pred_check
      _
    $region7: #{tpu_custom_call.1} parent=1 // pred_check_branch
      %19 = sbr.rel (0) target = $region9
    $region8: #{tpu_custom_call.1} parent=1 // pred_region
      %20 = dma.done [#allocation3], 256
    $region9: #{tpu_custom_call.1} parent=1 // pred_fallthru
      _
    %v21 = vld [vmem:[#allocation2] sm:$0xff]
    %v22 = vld [vmem:[#allocation2 + $0x8] sm:$0xff]
    %v23 = vadd.f32 %v21, 3.0
    %v24 = vadd.f32 %v22, 3.0
    %v25 = vmax.f32 %v23, 0.0
    %v26 = vmax.f32 %v24, 0.0
    %v27 = vmin.f32 %v25, 6.0
    %v28 = vmin.f32 %v26, 6.0
    %v29 = vmul.f32 %v27, 0.16666667
    %v30 = vmul.f32 %v28, 0.16666667
    %31 = vst [vmem:[#allocation5] sm:$0xff] %v29
    %32 = vst [vmem:[#allocation5 + $0x8] sm:$0xff] %v30
    // Predicated region
    $region10: #{tpu_custom_call.1} parent=1 // pred_check
      _
    $region11: #{tpu_custom_call.1} parent=1 // pred_check_branch
      %34 = sbr.rel (0) target = $region13
    $region12: #{tpu_custom_call.1} parent=1 // pred_region
      %s36 = ssub.s32 256, 256
      %37 = vsyncadd [#allocation4], %s36
      %s39 = sshll.u32 [#allocation5], 4
      %s40 = int_to_ptr.vmem [resolvable:$true] %s39
      %42 = dma.vmem_to_hbm [thread:$0]  %s40, 256, %s1, [#allocation4]
    $region13: #{tpu_custom_call.1} parent=1 // pred_fallthru
      _
    // Predicated region
    $region14: #{tpu_custom_call.1} parent=1 // pred_check
      _
    $region15: #{tpu_custom_call.1} parent=1 // pred_check_branch
      %44 = sbr.rel (0) target = $region17
    $region16: #{tpu_custom_call.1} parent=1 // pred_region
      %45 = dma.done [#allocation4], 256
    $region17: #{tpu_custom_call.1} parent=1 // pred_fallthru
      _
    %46 = vsyncpa [#allocation3], 1
    %47 = vsyncpa [#allocation4], 1

</llo_original>
